<compile_context>
chip_gen: v6e
topology: v6e:2x2x1
jax: 0.10.0
libtpu: 0.0.40
codegen_flags: <defaults>
</compile_context>

<pallas_src>
import functools
import math

import jax
import jax.numpy as jnp
from jax import lax
from jax.experimental import pallas as pl
from jax.experimental.pallas import tpu as pltpu


def _vmem_budget_bytes():
    """Chip-aware VMEM budget: leave headroom below physical capacity."""
    try:
        cap = int(pltpu.get_tpu_info().vmem_capacity_bytes)
    except Exception:
        cap = 64 * 1024 * 1024                     # conservative fallback (v7x-sized)
    if cap <= 64 * 1024 * 1024:
        # v7x-class (64 MiB/TC): never request it all; Mosaic needs internal scratch.
        return min(cap - 12 * 1024 * 1024, 52 * 1024 * 1024)
    # 128 MiB parts (v5e / v6e): use most of it, keep ~24 MiB headroom.
    return min(cap - 24 * 1024 * 1024, 104 * 1024 * 1024)


def _select_row_tile(N, dk, qkv_bytes, ku_bytes, attn_bytes, budget):
    """Largest row tile (divisor of N, multiple of 8 or == N) fitting the budget."""
    fixed = 2 * 2 * N * dk * qkv_bytes             # K + V inputs, double-buffered

    def per_step(tq):
        return (2 * tq * dk * qkv_bytes            # Q row tile (double-buffered)
                + 2 * tq * dk * ku_bytes           # Ku output block
                + 2 * tq * N * attn_bytes          # attn output block (dominant)
                + 3 * tq * N * 4)                  # f32 scores/e/w intermediates

    cands = [c for c in range(N, 0, -1) if N % c == 0 and (c % 8 == 0 or c == N)]
    for c in cands:
        if fixed + per_step(c) <= budget:
            return c
    return cands[-1]                               # best effort (smallest divisor)


def _qkv_projection_kernel(u_ref, w_ref, b_ref, q_ref, k_ref, v_ref, *, dk):
    # Fused projection: one MXU pass per row tile, f32 accumulation.
    qkv = jnp.dot(u_ref[...], w_ref[...],
                  preferred_element_type=jnp.float32) + b_ref[...]
    q_ref[...] = qkv[:, 0:dk].astype(q_ref.dtype)
    k_ref[...] = qkv[:, dk:2 * dk].astype(k_ref.dtype)
    v_ref[...] = qkv[:, 2 * dk:3 * dk].astype(v_ref.dtype)


def _attention_kernel(q_ref, k_ref, v_ref, ku_ref, attn_ref, *, scale):
    # (tq, N) scores: contract last dims directly, no materialized K transpose.
    scores = lax.dot_general(
        q_ref[...], k_ref[...],
        dimension_numbers=(((1,), (1,)), ((), ())),
        preferred_element_type=jnp.float32) * scale

    # Numerically stable softmax along the key axis (f32 math).
    m = jnp.max(scores, axis=-1, keepdims=True)
    e = jnp.exp(scores - m)
    denom = jnp.sum(e, axis=-1, keepdims=True)
    r = pl.reciprocal(denom, approx=True)          # EUP slot (otherwise mostly idle)
    r = r * (2.0 - denom * r)                      # one Newton step -> ~exact 1/denom
    w = e * r

    # Weighted sum of values: (tq, dk). Cast the left operand to V's storage dtype
    # so MXU operand loads stay narrow for bf16 inputs; accumulation stays f32.
    ku = jnp.dot(w.astype(v_ref.dtype), v_ref[...],
                 preferred_element_type=jnp.float32)

    ku_ref[...] = ku.astype(ku_ref.dtype)
    attn_ref[...] = w.astype(attn_ref.dtype)


def neural_operator_layer(u, w_qkv, b_qkv, dk, *, out_dtype=None, attn_dtype=None):
    """u: [B, N, D]; w_qkv: [D, 3*dk] (= [WQ^T | WK^T | WV^T]); b_qkv: [1, 3*dk]."""
    B, N, D = u.shape
    assert w_qkv.shape == (D, 3 * dk) and b_qkv.shape == (1, 3 * dk)

    out_dtype = u.dtype if out_dtype is None else jnp.dtype(out_dtype)
    attn_dtype = u.dtype if attn_dtype is None else jnp.dtype(attn_dtype)
    qkv_dtype = u.dtype                            # Q/K/V storage dtype
    scale = 1.0 / math.sqrt(float(dk))             # host-side constant, no device trip

    budget = _vmem_budget_bytes()
    tq = _select_row_tile(
        N, dk,
        qkv_bytes=jnp.dtype(qkv_dtype).itemsize,
        ku_bytes=jnp.dtype(out_dtype).itemsize,
        attn_bytes=jnp.dtype(attn_dtype).itemsize,
        budget=budget)
    grid = (B, N // tq)

    # --- 1) fused Q/K/V projection (own pallas_call: no per-batch pipeline bubble
    #        inside the attention grid; both axes fully parallel).
    q, k, v = pl.pallas_call(
        functools.partial(_qkv_projection_kernel, dk=dk),
        out_shape=tuple(jax.ShapeDtypeStruct((B, N, dk), qkv_dtype) for _ in range(3)),
        grid_spec=pltpu.PrefetchScalarGridSpec(
            num_scalar_prefetch=0,
            grid=grid,
            in_specs=[
                pl.BlockSpec((None, tq, D), lambda b, qi: (b, qi, 0)),   # u row tile
                pl.BlockSpec((D, 3 * dk), lambda b, qi: (0, 0)),         # fused W (resident)
                pl.BlockSpec((1, 3 * dk), lambda b, qi: (0, 0)),         # fused bias
            ],
            out_specs=[
                pl.BlockSpec((None, tq, dk), lambda b, qi: (b, qi, 0)),  # Q
                pl.BlockSpec((None, tq, dk), lambda b, qi: (b, qi, 0)),  # K
                pl.BlockSpec((None, tq, dk), lambda b, qi: (b, qi, 0)),  # V
            ],
        ),
        compiler_params=pltpu.CompilerParams(
            dimension_semantics=("parallel", "parallel"),
            vmem_limit_bytes=budget,
        ),
    )(u, w_qkv, b_qkv)

    # --- 2) attention: K/V resident per batch element, Q / outputs tiled by row.
    ku, attn = pl.pallas_call(
        functools.partial(_attention_kernel, scale=scale),
        out_shape=(
            jax.ShapeDtypeStruct((B, N, dk), out_dtype),
            jax.ShapeDtypeStruct((B, N, N), attn_dtype),
        ),
        grid_spec=pltpu.PrefetchScalarGridSpec(
            num_scalar_prefetch=0,
            grid=grid,
            in_specs=[
                pl.BlockSpec((None, tq, dk), lambda b, qi: (b, qi, 0)),  # Q row tile
                pl.BlockSpec((None, N, dk), lambda b, qi: (b, 0, 0)),    # K (resident over qi)
                pl.BlockSpec((None, N, dk), lambda b, qi: (b, 0, 0)),    # V (resident over qi)
            ],
            out_specs=[
                pl.BlockSpec((None, tq, dk), lambda b, qi: (b, qi, 0)),  # Ku
                pl.BlockSpec((None, tq, N), lambda b, qi: (b, qi, 0)),   # attn
            ],
        ),
        compiler_params=pltpu.CompilerParams(
            dimension_semantics=("parallel", "parallel"),
            vmem_limit_bytes=budget,
        ),
    )(q, k, v)
    return ku, attn


def _reference(u, wq, bq, wk, bk, wv, bv, dk):
    q = u @ wq + bq
    k = u @ wk + bk
    v = u @ wv + bv
    scores = jnp.einsum("bnd,bmd->bnm", q, k) / jnp.sqrt(jnp.float32(dk))
    w = jax.nn.softmax(scores, axis=-1)
    return jnp.einsum("bnm,bmd->bnd", w, v), w


if __name__ == "__main__":
    # Small shapes consistent with the forward: u [batch, N, input_dim].
    batch, N, input_dim, dk = 2, 16, 8, 32

    key = jax.random.PRNGKey(0)
    ks = jax.random.split(key, 7)

    # Linear params stored transposed as [input_dim, dk] so the kernel does
    # x @ W + b (matches torch.nn.Linear's y = x @ W.T + b).
    bound = 1.0 / math.sqrt(float(input_dim))
    wq = jax.random.uniform(ks[0], (input_dim, dk), jnp.float32, -bound, bound)
    wk = jax.random.uniform(ks[1], (input_dim, dk), jnp.float32, -bound, bound)
    wv = jax.random.uniform(ks[2], (input_dim, dk), jnp.float32, -bound, bound)
    bq = jax.random.uniform(ks[3], (1, dk), jnp.float32, -bound, bound)
    bk = jax.random.uniform(ks[4], (1, dk), jnp.float32, -bound, bound)
    bv = jax.random.uniform(ks[5], (1, dk), jnp.float32, -bound, bound)

    u = jax.random.normal(ks[6], (batch, N, input_dim), jnp.float32)

    # Fuse projections for the kernel.
    w_qkv = jnp.concatenate([wq, wk, wv], axis=1)      # [D, 3*dk]
    b_qkv = jnp.concatenate([bq, bk, bv], axis=1)      # [1, 3*dk]

    ku, attn = neural_operator_layer(u, w_qkv, b_qkv, dk)
    ku, attn = jax.block_until_ready((ku, attn))

    ku_ref, attn_ref = _reference(u, wq, bq, wk, bk, wv, bv, dk)
    assert ku.shape == (batch, N, dk) and attn.shape == (batch, N, N)
    assert jnp.allclose(ku, ku_ref, atol=1e-4, rtol=1e-4), "Ku mismatch"
    assert jnp.allclose(attn, attn_ref, atol=1e-5, rtol=1e-4), "attn mismatch"

    print("KERNEL_OK")
</pallas_src>

<mosaic_0001>
module attributes {stable_mosaic.version = 11 : i64} {
  func.func @_qkv_projection_kernel(%arg0: i32, %arg1: i32, %arg2: memref<1x16x8xf32, #tpu.memory_space<vmem>>, %arg3: memref<8x96xf32, #tpu.memory_space<vmem>>, %arg4: memref<1x96xf32, #tpu.memory_space<vmem>>, %arg5: memref<1x16x32xf32, #tpu.memory_space<vmem>>, %arg6: memref<1x16x32xf32, #tpu.memory_space<vmem>>, %arg7: memref<1x16x32xf32, #tpu.memory_space<vmem>>) attributes {dimension_semantics = [#tpu.dimension_semantics<parallel>, #tpu.dimension_semantics<parallel>], iteration_bounds = array<i64: 2, 1>, scalar_prefetch = 0 : i64, scratch_operands = 0 : i64, tpu.core_type = #tpu.core_type<tc>, window_params = [{transform_indices = @transform_0, window_bounds = array<i64: 1, 16, 8>}, {pipeline_mode = #tpu.pipeline_mode<synchronous>, transform_indices = @transform_1, window_bounds = array<i64: 8, 96>}, {pipeline_mode = #tpu.pipeline_mode<synchronous>, transform_indices = @transform_2, window_bounds = array<i64: 1, 96>}, {transform_indices = @transform_3, window_bounds = array<i64: 1, 16, 32>}, {transform_indices = @transform_4, window_bounds = array<i64: 1, 16, 32>}, {transform_indices = @transform_5, window_bounds = array<i64: 1, 16, 32>}]} {
    %c0 = arith.constant 0 : index
    %c0_0 = arith.constant 0 : index
    %c0_1 = arith.constant 0 : index
    %0 = vector.load %arg2[%c0, %c0_0, %c0_1] : memref<1x16x8xf32, #tpu.memory_space<vmem>>, vector<1x16x8xf32>
    %1 = vector.shape_cast %0 : vector<1x16x8xf32> to vector<16x8xf32>
    %c0_2 = arith.constant 0 : index
    %c0_3 = arith.constant 0 : index
    %2 = vector.load %arg3[%c0_2, %c0_3] : memref<8x96xf32, #tpu.memory_space<vmem>>, vector<8x96xf32>
    %cst = arith.constant dense<0.000000e+00> : vector<16x96xf32>
    %3 = tpu.matmul %1, %2, %cst {dimension_numbers = #tpu.dot_dimension_numbers<[1], [0], [0], [1], [0, 0, 1, 1], [], []>} : vector<16x8xf32>, vector<8x96xf32>, vector<16x96xf32> -> vector<16x96xf32>
    %c0_4 = arith.constant 0 : index
    %c0_5 = arith.constant 0 : index
    %4 = vector.load %arg4[%c0_4, %c0_5] : memref<1x96xf32, #tpu.memory_space<vmem>>, vector<1x96xf32>
    %5 = vector.broadcast %4 : vector<1x96xf32> to vector<16x96xf32>
    %6 = arith.addf %3, %5 : vector<16x96xf32>
    %7 = vector.extract_strided_slice %6 {offsets = [0, 0], sizes = [16, 32], strides = [1, 1]} : vector<16x96xf32> to vector<16x32xf32>
    %c0_6 = arith.constant 0 : index
    %c0_7 = arith.constant 0 : index
    %c0_8 = arith.constant 0 : index
    %8 = vector.load %arg5[%c0_6, %c0_7, %c0_8] : memref<1x16x32xf32, #tpu.memory_space<vmem>>, vector<1x16x32xf32>
    %9 = vector.shape_cast %8 : vector<1x16x32xf32> to vector<16x32xf32>
    %10 = vector.shape_cast %7 : vector<16x32xf32> to vector<1x16x32xf32>
    tpu.vector_store %arg5[%c0_6, %c0_7, %c0_8], %10 {strides = array<i32>} : memref<1x16x32xf32, #tpu.memory_space<vmem>>, vector<1x16x32xf32>,
    %11 = vector.extract_strided_slice %6 {offsets = [0, 32], sizes = [16, 32], strides = [1, 1]} : vector<16x96xf32> to vector<16x32xf32>
    %c0_9 = arith.constant 0 : index
    %c0_10 = arith.constant 0 : index
    %c0_11 = arith.constant 0 : index
    %12 = vector.load %arg6[%c0_9, %c0_10, %c0_11] : memref<1x16x32xf32, #tpu.memory_space<vmem>>, vector<1x16x32xf32>
    %13 = vector.shape_cast %12 : vector<1x16x32xf32> to vector<16x32xf32>
    %14 = vector.shape_cast %11 : vector<16x32xf32> to vector<1x16x32xf32>
    tpu.vector_store %arg6[%c0_9, %c0_10, %c0_11], %14 {strides = array<i32>} : memref<1x16x32xf32, #tpu.memory_space<vmem>>, vector<1x16x32xf32>,
    %15 = vector.extract_strided_slice %6 {offsets = [0, 64], sizes = [16, 32], strides = [1, 1]} : vector<16x96xf32> to vector<16x32xf32>
    %c0_12 = arith.constant 0 : index
    %c0_13 = arith.constant 0 : index
    %c0_14 = arith.constant 0 : index
    %16 = vector.load %arg7[%c0_12, %c0_13, %c0_14] : memref<1x16x32xf32, #tpu.memory_space<vmem>>, vector<1x16x32xf32>
    %17 = vector.shape_cast %16 : vector<1x16x32xf32> to vector<16x32xf32>
    %18 = vector.shape_cast %15 : vector<16x32xf32> to vector<1x16x32xf32>
    tpu.vector_store %arg7[%c0_12, %c0_13, %c0_14], %18 {strides = array<i32>} : memref<1x16x32xf32, #tpu.memory_space<vmem>>, vector<1x16x32xf32>,
    return
  }
  func.func @transform_0(%arg0: i32, %arg1: i32) -> (i32, i32, i32) {
    %c0_i32 = arith.constant 0 : i32
    %c0_i32_0 = arith.constant 0 : i32
    return %arg0, %arg1, %c0_i32 : i32, i32, i32
  }
  func.func @transform_1(%arg0: i32, %arg1: i32) -> (i32, i32) {
    %c0_i32 = arith.constant 0 : i32
    %c0_i32_0 = arith.constant 0 : i32
    %c0_i32_1 = arith.constant 0 : i32
    return %c0_i32, %c0_i32_0 : i32, i32
  }
  func.func @transform_2(%arg0: i32, %arg1: i32) -> (i32, i32) {
    %c0_i32 = arith.constant 0 : i32
    %c0_i32_0 = arith.constant 0 : i32
    %c0_i32_1 = arith.constant 0 : i32
    return %c0_i32, %c0_i32_0 : i32, i32
  }
  func.func @transform_3(%arg0: i32, %arg1: i32) -> (i32, i32, i32) {
    %c0_i32 = arith.constant 0 : i32
    %c0_i32_0 = arith.constant 0 : i32
    return %arg0, %arg1, %c0_i32 : i32, i32, i32
  }
  func.func @transform_4(%arg0: i32, %arg1: i32) -> (i32, i32, i32) {
    %c0_i32 = arith.constant 0 : i32
    %c0_i32_0 = arith.constant 0 : i32
    return %arg0, %arg1, %c0_i32 : i32, i32, i32
  }
  func.func @transform_5(%arg0: i32, %arg1: i32) -> (i32, i32, i32) {
    %c0_i32 = arith.constant 0 : i32
    %c0_i32_0 = arith.constant 0 : i32
    return %arg0, %arg1, %c0_i32 : i32, i32, i32
  }
}

</mosaic_0001>

<llo_original>
// kernel: tpu_custom_call.1
$region0: #{tpu_custom_call.1}
  #allocation0 [shape = 'u32[]', space=smem, size = 0x4, offset = 0x4, fixed_abs, tag = 'smem constant byte address 0x4 - core index']
  #allocation1 [shape = 'u32[144,128]{1,0:T(1,128)}', space=vmem, size = 0x12000, scoped, tag = 'internal scratch']
  %s0 = inlined_call_operand.vmem [shape: f32[2,16,8], index: 0, kind: input, shape index: {}]
  %s1 = inlined_call_operand.vmem [shape: f32[8,96], index: 1, kind: input, shape index: {}]
  %s2 = inlined_call_operand.vmem [shape: f32[1,96], index: 2, kind: input, shape index: {}]
  %s3 = inlined_call_operand.hbm [shape: f32[2,16,32], index: 3, kind: output, shape index: {0}]
  %s4 = inlined_call_operand.hbm [shape: f32[2,16,32], index: 4, kind: output, shape index: {1}]
  %s5 = inlined_call_operand.hbm [shape: f32[2,16,32], index: 5, kind: output, shape index: {2}]
  %6 = xla_tuple %s3, %s4, %s5
  %s7 = sld [smem:[#allocation0]]
  $region61: #{tpu_custom_call.1} parent=0
    _
  %s9 = ssub.s32 1, %s7
  %s10 = scalar_select 0, %s9, %s7
  $region1: #{tpu_custom_call.1} parent=0
    #allocation2 [shape = 'u8[16384]{0}', space=vmem, size = 0x4000, scoped, tag = 'output window, operand 0']
    #allocation3 [shape = 's32[2]{0}', space=sflag, size = 0x8, scoped, tag = 'scoped memory for tpu_custom_call.1']
    #allocation4 [shape = 'u8[16384]{0}', space=vmem, size = 0x4000, scoped, tag = 'output window, operand 1']
    #allocation5 [shape = 's32[2]{0}', space=sflag, size = 0x8, scoped, tag = 'scoped memory for tpu_custom_call.1']
    #allocation6 [shape = 'u8[16384]{0}', space=vmem, size = 0x4000, scoped, tag = 'output window, operand 2']
    %11 = vsyncpa [#allocation3], 0
    %s12 = scalar_lea.sflag [#allocation3], 1
    %13 = vsyncpa %s12, 0
    %14 = vsyncpa [#allocation5], 0
    %s15 = scalar_lea.sflag [#allocation5], 1
    %16 = vsyncpa %s15, 0
    loop: start=0, step=1, limit=4
    $region2: #{tpu_custom_call.1} parent=1 // loop_pre_header
      _
    $region3: #{tpu_custom_call.1} parent=1 // loop_header
      %s18 = sphi 0, %s22
      %p19 = scmp.ge.s32.totalorder %s18, 4
      %s25 = sphi 0, %s37
      %s26 = sphi 0, %s33
      %s27 = sphi 0, %s25
      %s28 = sphi 0, %s26
      %s29 = sphi 0, %s27
      %s30 = sphi 0, %s28
      %s42 = sphi 0, %s44
      %s45 = sphi 0, %s42
      %s46 = sphi 0, %s45
      %s62 = sphi 0, %s46
      %s66 = sphi 0, %s66
      %s68 = sphi 0, %s66
      %s69 = sphi 0, %s68
      %s83 = sphi 0, %s69
      %s87 = sphi 0, %s87
      %s89 = sphi 0, %s87
      %s90 = sphi 0, %s89
      %s104 = sphi 0, %s90
      %s112 = sphi 0, %s114
      %s115 = sphi 0, %s112
      %s116 = sphi 0, %s115
      %s132 = sphi 0, %s116
      %s140 = sphi 0, %s142
      %s143 = sphi 0, %s140
      %s144 = sphi 0, %s143
      %s160 = sphi 0, %s144
      %s168 = sphi 0, %s170
      %s171 = sphi 0, %s168
      %s172 = sphi 0, %s171
      %s188 = sphi 0, %s172
    $region4: #{tpu_custom_call.1} parent=1 // loop_header_branch
      %21 = sbr.rel (%p19) target = $region8
    $region5: #{tpu_custom_call.1} parent=1 // loop_body
      %s23 = ssub.s32 %s18, 1
      %s24 = ssub.s32 %s18, 2
      %s31 = sadd.s32 1, %s26
      %p32 = scmp.ge.s32.totalorder %s31, 1
      %s33 = scalar_select %p32, 0, %s31
      %s34 = sadd.s32 1, %s25
      %s35 = scalar_select %p32, %s34, %s25
      %p36 = scmp.ge.s32.totalorder %s35, 2
      %s37 = scalar_select %p36, 0, %s35
      %s38 = ssub.s32 %s25, %s37
      %s39 = ssub.s32 %s26, %s33
      %s40 = sor.u32 %s38, %s39
      %p41 = scmp.eq.s32.totalorder %s40, 0
      %s43 = sadd.s32 %s42, 1
      %s44 = scalar_select %p41, %s42, %s43
      %p47 = pneg %p41
      %p48 = scmp.eq.s32.totalorder %s18, 1
      %p49 = por %p47, %p48
      %p50 = scmp.ne.s32.totalorder %s42, %s45
      %p51 = scmp.eq.s32.totalorder %s18, 0
      %p52 = por %p50, %p51
      %p53 = scmp.ne.s32.totalorder %s42, %s45
      %p54 = scmp.eq.s32.totalorder %s23, 1
      %p55 = por %p53, %p54
      %p56 = scmp.ne.s32.totalorder %s45, %s46
      %p57 = scmp.eq.s32.totalorder %s23, 0
      %p58 = por %p56, %p57
      %p59 = scmp.ne.s32.totalorder %s45, %s46
      %p60 = scmp.eq.s32.totalorder %s24, 1
      %p61 = por %p59, %p60
      %p63 = scmp.ne.s32.totalorder %s46, %s62
      %p64 = scmp.eq.s32.totalorder %s24, 0
      %p65 = por %p63, %p64
      %s67 = sadd.s32 %s66, 1
      %p70 = scmp.eq.s32.totalorder %s18, 1
      %p71 = scmp.ne.s32.totalorder %s66, %s68
      %p72 = scmp.eq.s32.totalorder %s18, 0
      %p73 = por %p71, %p72
      %p74 = scmp.ne.s32.totalorder %s66, %s68
      %p75 = scmp.eq.s32.totalorder %s23, 1
      %p76 = por %p74, %p75
      %p77 = scmp.ne.s32.totalorder %s68, %s69
      %p78 = scmp.eq.s32.totalorder %s23, 0
      %p79 = por %p77, %p78
      %p80 = scmp.ne.s32.totalorder %s68, %s69
      %p81 = scmp.eq.s32.totalorder %s24, 1
      %p82 = por %p80, %p81
      %p84 = scmp.ne.s32.totalorder %s69, %s83
      %p85 = scmp.eq.s32.totalorder %s24, 0
      %p86 = por %p84, %p85
      %s88 = sadd.s32 %s87, 1
      %p91 = scmp.eq.s32.totalorder %s18, 1
      %p92 = scmp.ne.s32.totalorder %s87, %s89
      %p93 = scmp.eq.s32.totalorder %s18, 0
      %p94 = por %p92, %p93
      %p95 = scmp.ne.s32.totalorder %s87, %s89
      %p96 = scmp.eq.s32.totalorder %s23, 1
      %p97 = por %p95, %p96
      %p98 = scmp.ne.s32.totalorder %s89, %s90
      %p99 = scmp.eq.s32.totalorder %s23, 0
      %p100 = por %p98, %p99
      %p101 = scmp.ne.s32.totalorder %s89, %s90
      %p102 = scmp.eq.s32.totalorder %s24, 1
      %p103 = por %p101, %p102
      %p105 = scmp.ne.s32.totalorder %s90, %s104
      %p106 = scmp.eq.s32.totalorder %s24, 0
      %p107 = por %p105, %p106
      %s108 = ssub.s32 %s25, %s37
      %s109 = ssub.s32 %s26, %s33
      %s110 = sor.u32 %s108, %s109
      %p111 = scmp.eq.s32.totalorder %s110, 0
      %s113 = sadd.s32 %s112, 1
      %s114 = scalar_select %p111, %s112, %s113
      %p117 = pneg %p111
      %p118 = scmp.eq.s32.totalorder %s18, 1
      %p119 = por %p117, %p118
      %p120 = scmp.ne.s32.totalorder %s112, %s115
      %p121 = scmp.eq.s32.totalorder %s18, 0
      %p122 = por %p120, %p121
      %p123 = scmp.ne.s32.totalorder %s112, %s115
      %p124 = scmp.eq.s32.totalorder %s23, 1
      %p125 = por %p123, %p124
      %p126 = scmp.ne.s32.totalorder %s115, %s116
      %p127 = scmp.eq.s32.totalorder %s23, 0
      %p128 = por %p126, %p127
      %p129 = scmp.ne.s32.totalorder %s115, %s116
      %p130 = scmp.eq.s32.totalorder %s24, 1
      %p131 = por %p129, %p130
      %p133 = scmp.ne.s32.totalorder %s116, %s132
      %p134 = scmp.eq.s32.totalorder %s24, 0
      %p135 = por %p133, %p134
      %s136 = ssub.s32 %s25, %s37
      %s137 = ssub.s32 %s26, %s33
      %s138 = sor.u32 %s136, %s137
      %p139 = scmp.eq.s32.totalorder %s138, 0
      %s141 = sadd.s32 %s140, 1
      %s142 = scalar_select %p139, %s140, %s141
      %p145 = pneg %p139
      %p146 = scmp.eq.s32.totalorder %s18, 1
      %p147 = por %p145, %p146
      %p148 = scmp.ne.s32.totalorder %s140, %s143
      %p149 = scmp.eq.s32.totalorder %s18, 0
      %p150 = por %p148, %p149
      %p151 = scmp.ne.s32.totalorder %s140, %s143
      %p152 = scmp.eq.s32.totalorder %s23, 1
      %p153 = por %p151, %p152
      %p154 = scmp.ne.s32.totalorder %s143, %s144
      %p155 = scmp.eq.s32.totalorder %s23, 0
      %p156 = por %p154, %p155
      %p157 = scmp.ne.s32.totalorder %s143, %s144
      %p158 = scmp.eq.s32.totalorder %s24, 1
      %p159 = por %p157, %p158
      %p161 = scmp.ne.s32.totalorder %s144, %s160
      %p162 = scmp.eq.s32.totalorder %s24, 0
      %p163 = por %p161, %p162
      %s164 = ssub.s32 %s25, %s37
      %s165 = ssub.s32 %s26, %s33
      %s166 = sor.u32 %s164, %s165
      %p167 = scmp.eq.s32.totalorder %s166, 0
      %s169 = sadd.s32 %s168, 1
      %s170 = scalar_select %p167, %s168, %s169
      %p173 = pneg %p167
      %p174 = scmp.eq.s32.totalorder %s18, 1
      %p175 = por %p173, %p174
      %p176 = scmp.ne.s32.totalorder %s168, %s171
      %p177 = scmp.eq.s32.totalorder %s18, 0
      %p178 = por %p176, %p177
      %p179 = scmp.ne.s32.totalorder %s168, %s171
      %p180 = scmp.eq.s32.totalorder %s23, 1
      %p181 = por %p179, %p180
      %p182 = scmp.ne.s32.totalorder %s171, %s172
      %p183 = scmp.eq.s32.totalorder %s23, 0
      %p184 = por %p182, %p183
      %p185 = scmp.ne.s32.totalorder %s171, %s172
      %p186 = scmp.eq.s32.totalorder %s24, 1
      %p187 = por %p185, %p186
      %p189 = scmp.ne.s32.totalorder %s172, %s188
      %p190 = scmp.eq.s32.totalorder %s24, 0
      %p191 = por %p189, %p190
      %p192 = scmp.le.s32.totalorder 1, %s18
      %p193 = scmp.lt.s32.totalorder %s18, 3
      %p194 = pnand %p192, %p193
      %p195 = pneg %p194
      // Predicated region
      $region9: #{tpu_custom_call.1} parent=5 // pred_check
        _
      $region10: #{tpu_custom_call.1} parent=5 // pred_check_branch
        %197 = sbr.rel (%p194) target = $region12
      $region11: #{tpu_custom_call.1} parent=5 // pred_region
        %s198 = ssub.s32 %s18, 1
        // Predicated region
        $region13: #{tpu_custom_call.1} parent=11 // pred_check
          %p199 = pneg %p79
        $region14: #{tpu_custom_call.1} parent=11 // pred_check_branch
          %201 = sbr.rel (%p199) target = $region16
        $region15: #{tpu_custom_call.1} parent=11 // pred_region
          _
        $region16: #{tpu_custom_call.1} parent=11 // pred_fallthru
          _
        // Predicated region
        $region17: #{tpu_custom_call.1} parent=11 // pred_check
          %p202 = pneg %p100
        $region18: #{tpu_custom_call.1} parent=11 // pred_check_branch
          %204 = sbr.rel (%p202) target = $region20
        $region19: #{tpu_custom_call.1} parent=11 // pred_region
          _
        $region20: #{tpu_custom_call.1} parent=11 // pred_fallthru
          _
      $region12: #{tpu_custom_call.1} parent=5 // pred_fallthru
        _
      %p205 = scmp.lt.s32.totalorder %s18, 2
      // Predicated region
      $region21: #{tpu_custom_call.1} parent=5 // pred_check
        %p206 = pneg %p205
      $region22: #{tpu_custom_call.1} parent=5 // pred_check_branch
        %208 = sbr.rel (%p206) target = $region24
      $region23: #{tpu_custom_call.1} parent=5 // pred_region
        // Predicated region
        $region25: #{tpu_custom_call.1} parent=23 // pred_check
          %p209 = pneg %p52
        $region26: #{tpu_custom_call.1} parent=23 // pred_check_branch
          %211 = sbr.rel (%p209) target = $region28
        $region27: #{tpu_custom_call.1} parent=23 // pred_region
          %s212 = smul.u32 2, %s26
          %p213 = scmp.lt.s32.totalorder %s25, 1
          %s214 = scalar_select %p213, %s25, 1
          %p215 = scmp.lt.s32.totalorder %s212, 1
          %s216 = scalar_select %p215, %s212, 1
          %s217 = smul.addr %s214, 2
          %s218 = sadd.s32 %s216, %s217
          %s219 = smul.addr %s218, 8
          %s220 = scalar_lea.vmem %s0, %s219
          %s221 = smul.u32 2, %s26
        $region28: #{tpu_custom_call.1} parent=23 // pred_fallthru
          _
      $region24: #{tpu_custom_call.1} parent=5 // pred_fallthru
        _
      %p222 = scmp.le.s32.totalorder 1, %s18
      %p223 = scmp.lt.s32.totalorder %s18, 3
      %p224 = pnand %p222, %p223
      %p225 = pneg %p224
      // Predicated region
      $region29: #{tpu_custom_call.1} parent=5 // pred_check
        _
      $region30: #{tpu_custom_call.1} parent=5 // pred_check_branch
        %227 = sbr.rel (%p224) target = $region32
      $region31: #{tpu_custom_call.1} parent=5 // pred_region
        %s228 = ssub.s32 %s18, 1
        %s229 = smul.u32 2, %s28
        %p230 = scmp.lt.s32.totalorder %s27, 1
        %s231 = scalar_select %p230, %s27, 1
        %p232 = scmp.lt.s32.totalorder %s229, 1
        %s233 = scalar_select %p232, %s229, 1
        %s234 = smul.addr %s231, 2
        %s235 = sadd.s32 %s233, %s234
        %s236 = smul.addr %s235, 8
        %s237 = scalar_lea.vmem %s0, %s236
        %p238 = pneg %p58
        %p239 = pneg %p55
        %p240 = pneg %p79
        %p241 = pneg %p76
        %p242 = pneg %p100
        %p243 = pneg %p97
        %p244 = pneg %p128
        %p245 = pneg %p125
        %s246 = sand.u32 %s115, 1
        %s247 = scalar_lea.sflag [#allocation3], %s246
        %s248 = sand.u32 %s115, 1
        %s249 = smul.addr %s248, 16
        %s250 = scalar_lea.vmem [#allocation2], %s249
        %p251 = pneg %p156
        %p252 = pneg %p153
        %s253 = sand.u32 %s23, 1
        %s254 = scalar_lea.sflag [#allocation5], %s253
        %s255 = sand.u32 %s143, 1
        %s256 = smul.addr %s255, 16
        %s257 = scalar_lea.vmem [#allocation4], %s256
        %p258 = pneg %p184
        %p259 = pneg %p181
        %s260 = sand.u32 %s23, 1
        %s261 = scalar_lea.sflag [#allocation5], %s260
        %s262 = sand.u32 %s171, 1
        %s263 = smul.addr %s262, 16
        %s264 = scalar_lea.vmem [#allocation6], %s263
        %s265 = smul.u32 2, %s28
        %p266 = scmp.lt.s32.totalorder %s27, 1
        %s267 = scalar_select %p266, %s27, 1
        %p268 = scmp.lt.s32.totalorder %s265, 1
        %s269 = scalar_select %p268, %s265, 1
        %s270 = smul.addr %s267, 2
        %s271 = sadd.s32 %s269, %s270
        %s272 = smul.addr %s271, 8
        %s273 = scalar_lea.vmem %s0, %s272
        %s274 = smul.u32 2, %s28
        %s275 = smul.u32 2, %s28
        %s276 = smul.u32 2, %s28
        %s277 = smul.u32 2, %s28
        %v278 = vld [vmem:[%s273] sm:$0xff]
        %v279 = vld [vmem:[%s273 + $0x8] sm:$0xff]
        %v280 = vld [vmem:[%s1] sm:$0xff]
        %v281 = vld [vmem:[%s2] sm:$0x1]
        %v283 = vlaneseq
        %v284 = vshrl.u32 %v283, 7
        %v285 = vsub.s32 0, %v284
        %v286 = vrot.slane %v281, %v285
        %vm288 = vcmask 64512
        %v290 = vsel %vm288, %v278, 0
        %v293 = vsel %vm288, %v279, 0
        %295 = vmatprep.subr.mxu0 0.0
        %296 = vmatpush1.msra.mxu0 0.0
        %297 = vmatprep.subr.mxu0 0.0
        %298 = vmatpush1.msra.mxu0 0.0
        %299 = vmatprep.subr.mxu0 0.0
        %300 = vmatpush1.msra.mxu0 0.0
        %301 = vmatprep.subr.mxu0 0.0
        %302 = vmatpush1.msra.mxu0 0.0
        %303 = vmatprep.subr.mxu0 0.0
        %304 = vmatpush1.msra.mxu0 0.0
        %305 = vmatprep.subr.mxu0 0.0
        %306 = vmatpush1.msra.mxu0 0.0
        %307 = vmatprep.subr.mxu0 0.0
        %308 = vmatpush1.msra.mxu0 0.0
        %309 = vmatprep.subr.mxu0 0.0
        %310 = vmatpush1.msra.mxu0 0.0
        %311 = vmatprep.subr.mxu0 0.0
        %312 = vmatpush1.msra.mxu0 0.0
        %313 = vmatprep.subr.mxu0 0.0
        %314 = vmatpush1.msra.mxu0 0.0
        %315 = vmatprep.subr.mxu0 0.0
        %316 = vmatpush1.msra.mxu0 0.0
        %317 = vmatprep.subr.mxu0 0.0
        %318 = vmatpush1.msra.mxu0 0.0
        %319 = vmatprep.subr.mxu0 0.0
        %320 = vmatpush1.msra.mxu0 0.0
        %321 = vmatprep.subr.mxu0 0.0
        %322 = vmatpush1.msra.mxu0 0.0
        %323 = vmatprep.subr.mxu0 0.0
        %324 = vmatpush1.msra.mxu0 0.0
        %325 = vmatprep.subr.mxu0 0.0
        %326 = vmatpush1.msra.mxu0 %v280
        %327 = vmatprep.subr.mxu0 0.0
        %328 = vmatpush2.msra.mxu0 0.0
        %329 = vmatprep.subr.mxu0 0.0
        %330 = vmatpush2.msra.mxu0 0.0
        %331 = vmatprep.subr.mxu0 0.0
        %332 = vmatpush2.msra.mxu0 0.0
        %333 = vmatprep.subr.mxu0 0.0
        %334 = vmatpush2.msra.mxu0 0.0
        %335 = vmatprep.subr.mxu0 0.0
        %336 = vmatpush2.msra.mxu0 0.0
        %337 = vmatprep.subr.mxu0 0.0
        %338 = vmatpush2.msra.mxu0 0.0
        %339 = vmatprep.subr.mxu0 0.0
        %340 = vmatpush2.msra.mxu0 0.0
        %341 = vmatprep.subr.mxu0 0.0
        %342 = vmatpush2.msra.mxu0 0.0
        %343 = vmatprep.subr.mxu0 0.0
        %344 = vmatpush2.msra.mxu0 0.0
        %345 = vmatprep.subr.mxu0 0.0
        %346 = vmatpush2.msra.mxu0 0.0
        %347 = vmatprep.subr.mxu0 0.0
        %348 = vmatpush2.msra.mxu0 0.0
        %349 = vmatprep.subr.mxu0 0.0
        %350 = vmatpush2.msra.mxu0 0.0
        %351 = vmatprep.subr.mxu0 0.0
        %352 = vmatpush2.msra.mxu0 0.0
        %353 = vmatprep.subr.mxu0 0.0
        %354 = vmatpush2.msra.mxu0 0.0
        %355 = vmatprep.subr.mxu0 0.0
        %356 = vmatpush2.msra.mxu0 0.0
        %357 = vmatprep.subr.mxu0 0.0
        %358 = vmatpush2.msra.mxu0 0.0
        %359 = vmatprep.mubr.f32.mxu0 0.0
        %360 = vmatmul.mubr.f32.gmra.mxu0 %v290
        %v361 = vpop.f32.mrf.mxu0
        %v362 = vadd.f32 %v286, %v361
        %v363 = vpop.f32.mrf.mxu0
        %364 = vmatprep.mubr.f32.mxu0 0.0
        %365 = vmatmul.mubr.f32.gmra.mxu0 %v293
        %v366 = vpop.f32.mrf.mxu0
        %v367 = vadd.f32 %v286, %v366
        %v368 = vpop.f32.mrf.mxu0
        %369 = vdwg.mxu0
        %vm370 = vcmask 261120
        %371 = vst.msk [vmem:[%s250] sm:$0xff] %vm370, %v362
        %372 = vst.msk [vmem:[%s250 + $0x8] sm:$0xff] %vm370, %v367
        %375 = vrot.lane.b32.xlu0 %v362, 96
        %v376 = vpop.permute.xlu0 %375
        %377 = vrot.lane.b32.xlu0 %v367, 96
        %v378 = vpop.permute.xlu0 %377
        %381 = vst.msk [vmem:[%s257] sm:$0xff] %vm370, %v376
        %382 = vst.msk [vmem:[%s257 + $0x8] sm:$0xff] %vm370, %v378
        %383 = vrot.lane.b32.xlu0 %v362, 64
        %v384 = vpop.permute.xlu0 %383
        %385 = vrot.lane.b32.xlu0 %v367, 64
        %v386 = vpop.permute.xlu0 %385
        %389 = vst.msk [vmem:[%s264] sm:$0xff] %vm370, %v384
        %390 = vst.msk [vmem:[%s264 + $0x8] sm:$0xff] %vm370, %v386
        %s391 = sand.u32 %s115, 1
        %s392 = scalar_lea.sflag [#allocation3], %s391
        %s393 = sand.u32 %s115, 1
        %s394 = smul.addr %s393, 16
        %s395 = scalar_lea.vmem [#allocation2], %s394
        %s396 = sand.u32 %s23, 1
        %s397 = scalar_lea.sflag [#allocation5], %s396
        %s398 = sand.u32 %s143, 1
        %s399 = smul.addr %s398, 16
        %s400 = scalar_lea.vmem [#allocation4], %s399
        %s401 = sand.u32 %s23, 1
        %s402 = scalar_lea.sflag [#allocation5], %s401
        %s403 = sand.u32 %s171, 1
        %s404 = smul.addr %s403, 16
        %s405 = scalar_lea.vmem [#allocation6], %s404
        // Predicated region
        $region33: #{tpu_custom_call.1} parent=31 // pred_check
          %p406 = pneg %p125
        $region34: #{tpu_custom_call.1} parent=31 // pred_check_branch
          %408 = sbr.rel (%p406) target = $region36
        $region35: #{tpu_custom_call.1} parent=31 // pred_region
          %s409 = smul.u32 2, %s28
          %s411 = ssub.s32 256, 256
          %412 = vsyncadd %s392, %s411
          %s413 = smul.addr %s27, 2
          %s414 = sadd.s32 %s409, %s413
          %s415 = smul.addr %s414, 128
          %s416 = scalar_lea.hbm %s3, %s415
          %s417 = sshll.u32 %s395, 4
          %s418 = int_to_ptr.vmem [resolvable:$true] %s417
          %423 = dma.vmem_to_hbm [thread:$0]  %s418, 256, %s416, %s392, 128, 128, 8
        $region36: #{tpu_custom_call.1} parent=31 // pred_fallthru
          _
        // Predicated region
        $region37: #{tpu_custom_call.1} parent=31 // pred_check
          %p424 = pneg %p153
        $region38: #{tpu_custom_call.1} parent=31 // pred_check_branch
          %426 = sbr.rel (%p424) target = $region40
        $region39: #{tpu_custom_call.1} parent=31 // pred_region
          %s427 = smul.u32 2, %s28
          %s429 = ssub.s32 256, 256
          %430 = vsyncadd %s397, %s429
          %s431 = smul.addr %s27, 2
          %s432 = sadd.s32 %s427, %s431
          %s433 = smul.addr %s432, 128
          %s434 = scalar_lea.hbm %s4, %s433
          %s435 = sshll.u32 %s400, 4
          %s436 = int_to_ptr.vmem [resolvable:$true] %s435
          %441 = dma.vmem_to_hbm [thread:$0]  %s436, 256, %s434, %s397, 128, 128, 8
        $region40: #{tpu_custom_call.1} parent=31 // pred_fallthru
          _
        // Predicated region
        $region41: #{tpu_custom_call.1} parent=31 // pred_check
          %p442 = pneg %p181
        $region42: #{tpu_custom_call.1} parent=31 // pred_check_branch
          %444 = sbr.rel (%p442) target = $region44
        $region43: #{tpu_custom_call.1} parent=31 // pred_region
          %s445 = smul.u32 2, %s28
          %s447 = ssub.s32 256, 256
          %448 = vsyncadd %s402, %s447
          %s449 = smul.addr %s27, 2
          %s450 = sadd.s32 %s445, %s449
          %s451 = smul.addr %s450, 128
          %s452 = scalar_lea.hbm %s5, %s451
          %s453 = sshll.u32 %s405, 4
          %s454 = int_to_ptr.vmem [resolvable:$true] %s453
          %459 = dma.vmem_to_hbm [thread:$0]  %s454, 256, %s452, %s402, 128, 128, 8
        $region44: #{tpu_custom_call.1} parent=31 // pred_fallthru
          _
      $region32: #{tpu_custom_call.1} parent=5 // pred_fallthru
        _
      %p460 = scmp.le.s32.totalorder 2, %s18
      // Predicated region
      $region45: #{tpu_custom_call.1} parent=5 // pred_check
        %p461 = pneg %p460
      $region46: #{tpu_custom_call.1} parent=5 // pred_check_branch
        %463 = sbr.rel (%p461) target = $region48
      $region47: #{tpu_custom_call.1} parent=5 // pred_region
        %s464 = ssub.s32 %s18, 2
        // Predicated region
        $region49: #{tpu_custom_call.1} parent=47 // pred_check
          %p465 = pneg %p131
        $region50: #{tpu_custom_call.1} parent=47 // pred_check_branch
          %467 = sbr.rel (%p465) target = $region52
        $region51: #{tpu_custom_call.1} parent=47 // pred_region
          %s468 = sand.u32 %s116, 1
          %s469 = scalar_lea.sflag [#allocation3], %s468
          %s470 = sand.u32 %s116, 1
          %s471 = smul.addr %s470, 16
          %s472 = scalar_lea.vmem [#allocation2], %s471
          %473 = dma.done %s469, 256
        $region52: #{tpu_custom_call.1} parent=47 // pred_fallthru
          _
        // Predicated region
        $region53: #{tpu_custom_call.1} parent=47 // pred_check
          %p474 = pneg %p159
        $region54: #{tpu_custom_call.1} parent=47 // pred_check_branch
          %476 = sbr.rel (%p474) target = $region56
        $region55: #{tpu_custom_call.1} parent=47 // pred_region
          %s477 = sand.u32 %s24, 1
          %s478 = scalar_lea.sflag [#allocation5], %s477
          %s479 = sand.u32 %s144, 1
          %s480 = smul.addr %s479, 16
          %s481 = scalar_lea.vmem [#allocation4], %s480
          %482 = dma.done %s478, 256
        $region56: #{tpu_custom_call.1} parent=47 // pred_fallthru
          _
        // Predicated region
        $region57: #{tpu_custom_call.1} parent=47 // pred_check
          %p483 = pneg %p187
        $region58: #{tpu_custom_call.1} parent=47 // pred_check_branch
          %485 = sbr.rel (%p483) target = $region60
        $region59: #{tpu_custom_call.1} parent=47 // pred_region
          %s486 = sand.u32 %s24, 1
          %s487 = scalar_lea.sflag [#allocation5], %s486
          %s488 = sand.u32 %s172, 1
          %s489 = smul.addr %s488, 16
          %s490 = scalar_lea.vmem [#allocation6], %s489
          %491 = dma.done %s487, 256
        $region60: #{tpu_custom_call.1} parent=47 // pred_fallthru
          _
      $region48: #{tpu_custom_call.1} parent=5 // pred_fallthru
        _
    $region6: #{tpu_custom_call.1} parent=1 // loop_footer
      %s22 = sadd.s32 1, %s18
    $region7: #{tpu_custom_call.1} parent=1 // loop_footer_branch
      %17 = sbr.rel target = $region3
    $region8: #{tpu_custom_call.1} parent=1 // loop_exit
      _
    %492 = vsyncpa [#allocation3], 1
    %s493 = scalar_lea.sflag [#allocation3], 1
    %494 = vsyncpa %s493, 1
    %495 = vsyncpa [#allocation5], 1
    %s496 = scalar_lea.sflag [#allocation5], 1
    %497 = vsyncpa %s496, 1

</llo_original>
